<compile_context>
chip_gen: v7x
topology: tpu7x:2x2x1
jax: 0.10.0
libtpu: 0.0.40
codegen_flags: <defaults>
</compile_context>

<pallas_src>
import functools

import jax
import jax.numpy as jnp
from jax.experimental import pallas as pl
from jax.experimental.pallas import tpu as pltpu


def _round_up(x: int, m: int) -> int:
    return ((x + m - 1) // m) * m


def _pick_batch_tile(B: int):
    """Pick (tile_b, padded_B). tile_b is a multiple of 16 (bf16 sublane pack).

    Large batches -> >= 4 grid steps with tiles in [256, 1024] rows.
    Moderate batches -> 2 steps of >= 128 rows (keeps both v7x TCs busy).
    Small batches -> single tile rounded up to 16 rows.
    """
    if B >= 4 * 256:
        tile = min(1024, max(256, _round_up(-(-B // 4), 16)))
    elif B >= 2 * 128:
        tile = _round_up(-(-B // 2), 16)
    else:
        tile = _round_up(B, 16)
    return tile, _round_up(B, tile)


# ----------------------------- Pallas kernel ------------------------------ #
def _mlp_kernel(x_ref, w1_ref, b1_ref, w2_ref, b2_ref, o_ref, *, activation):
    # Layer 1: (TB, D_in) @ (D_in, H) -> f32 accumulation on the MXU.
    h = jnp.dot(x_ref[...], w1_ref[...], preferred_element_type=jnp.float32)
    h = h + b1_ref[...]
    # Activation stays f32 (v5e VPU/EUP have no bf16 path; EUP slot is idle).
    if activation == "relu":
        h = jnp.maximum(h, 0.0)
    elif activation == "tanh":
        h = jnp.tanh(h)
    elif activation == "sigmoid":
        h = jax.nn.sigmoid(h)
    else:
        raise ValueError(f"unknown activation {activation}")
    # Layer 2: cast h to the weight dtype (bf16) for the MXU, f32 accumulation.
    o = jnp.dot(h.astype(w2_ref.dtype), w2_ref[...],
                preferred_element_type=jnp.float32)
    # bf16 writeback halves output HBM traffic; bias added in f32 first.
    o_ref[...] = (o + b2_ref[...]).astype(o_ref.dtype)


def mlp_forward(x, w1, b1, w2, b2, *, activation="relu", tile_b=256):
    """Fused 2-layer MLP with a batch-tiled grid and VMEM-resident weights.

    x:  (B, D_in)   bf16, B a multiple of tile_b, D_in a multiple of 128
    w1: (D_in, H)   bf16, H a multiple of 128
    b1: (1, H)      f32
    w2: (H, D_out)  bf16, D_out a multiple of 128
    b2: (1, D_out)  f32
    Returns (B, D_out) bf16.
    """
    B, D_in = x.shape
    H = w1.shape[1]
    D_out = w2.shape[1]
    assert B % tile_b == 0
    grid = (B // tile_b,)

    # Cost estimate for XLA's scheduler around the custom call.
    flops = 2 * B * (D_in * H + H * D_out)
    transcendentals = B * H if activation in ("tanh", "sigmoid") else 0
    bytes_accessed = int(
        B * D_in * x.dtype.itemsize
        + w1.size * w1.dtype.itemsize + w2.size * w2.dtype.itemsize
        + b1.size * 4 + b2.size * 4
        + B * D_out * 2)                       # bf16 output writeback

    # VMEM budget: double-buffered x/out tiles, double-buffered (resident)
    # weights/biases, plus the live h intermediate (f32 + its bf16 cast).
    bytes_x_tile = tile_b * D_in * x.dtype.itemsize
    bytes_o_tile = tile_b * D_out * 2
    bytes_weights = (w1.size * w1.dtype.itemsize + w2.size * w2.dtype.itemsize
                     + b1.size * 4 + b2.size * 4)
    bytes_h = tile_b * H * (4 + 2)
    vmem_needed = 2 * (bytes_x_tile + bytes_o_tile) + 2 * bytes_weights + bytes_h

    # Generation-aware clamp (v5e/v6e: 128 MiB physical, v7x: 64 MiB).
    try:
        vmem_cap = int(pltpu.get_tpu_info().vmem_capacity_bytes)
    except Exception:
        vmem_cap = 64 << 20
    vmem_limit = int(min(max(int(vmem_needed * 1.5) + (2 << 20), 8 << 20),
                         vmem_cap - (4 << 20)))

    kernel = functools.partial(_mlp_kernel, activation=activation)
    return pl.pallas_call(
        kernel,
        out_shape=jax.ShapeDtypeStruct((B, D_out), jnp.bfloat16),
        grid_spec=pltpu.PrefetchScalarGridSpec(
            num_scalar_prefetch=0,
            grid=grid,
            in_specs=[
                pl.BlockSpec((tile_b, D_in), lambda i: (i, 0)),  # streamed
                pl.BlockSpec((D_in, H), lambda i: (0, 0)),       # resident
                pl.BlockSpec((1, H), lambda i: (0, 0)),          # resident
                pl.BlockSpec((H, D_out), lambda i: (0, 0)),      # resident
                pl.BlockSpec((1, D_out), lambda i: (0, 0)),      # resident
            ],
            out_specs=pl.BlockSpec((tile_b, D_out), lambda i: (i, 0)),
        ),
        compiler_params=pltpu.CompilerParams(
            dimension_semantics=("parallel",),   # v7x: shard batch over 2 TCs
            vmem_limit_bytes=vmem_limit,
        ),
        cost_estimate=pl.CostEstimate(flops=int(flops),
                                      transcendentals=int(transcendentals),
                                      bytes_accessed=bytes_accessed),
    )(x, w1, b1, w2, b2)


# --------------------------- Module-level glue ----------------------------- #
class FeedForwardBaselinePallas:
    """JAX/Pallas re-implementation of FeedForwardBaseline.forward."""

    LANE = 128     # pad feature dims to multiples of this

    def __init__(self, num_dofs, num_joints, history_len, output_data_format,
                 activation, stride, root_history_len, hidden_dims=(512,),
                 key=jax.random.PRNGKey(0)):
        self.activation = activation
        self.num_dofs = num_dofs
        self.num_joints = num_joints
        self.history_len = history_len
        self.root_history_len = root_history_len
        self.window = history_len // stride
        self.input_size = (num_dofs * 3 + 12 + num_joints * 3
                           + root_history_len * 6) * self.window
        self.num_output_frames = (self.window
                                  if output_data_format == "all_frames" else 1)
        self.output_size = 30 * self.num_output_frames

        dims = [self.input_size] + list(hidden_dims) + [self.output_size]
        assert len(dims) == 3, "this Pallas port fuses exactly 2 Linear layers"
        D_in, H, D_out = dims

        # Lane-dense padded sizes (zero padding is mathematically inert).
        self.d_in_p = _round_up(D_in, self.LANE)
        self.h_p = _round_up(H, self.LANE)
        self.d_out_p = _round_up(D_out, self.LANE)

        # Deterministic init (PyTorch nn.Linear-like uniform bound 1/sqrt(fan_in)),
        # done at the *unpadded* sizes, then zero-padded.
        k1, k2, k3, k4 = jax.random.split(key, 4)
        bound1 = 1.0 / jnp.sqrt(D_in)
        bound2 = 1.0 / jnp.sqrt(H)
        w1 = jax.random.uniform(k1, (D_in, H), jnp.float32, -bound1, bound1)
        b1 = jax.random.uniform(k2, (1, H), jnp.float32, -bound1, bound1)
        w2 = jax.random.uniform(k3, (H, D_out), jnp.float32, -bound2, bound2)
        b2 = jax.random.uniform(k4, (1, D_out), jnp.float32, -bound2, bound2)

        # Zero-pad: extra w1 rows (x pad cols are zero), extra w1/b1 cols
        # (hidden pad lanes), extra w2 rows (kill hidden pad lanes even for
        # sigmoid), extra w2/b2 cols (output pad lanes, sliced off in __call__).
        self.w1 = jnp.pad(w1, ((0, self.d_in_p - D_in),
                               (0, self.h_p - H))).astype(jnp.bfloat16)
        self.b1 = jnp.pad(b1, ((0, 0), (0, self.h_p - H)))                 # f32
        self.w2 = jnp.pad(w2, ((0, self.h_p - H),
                               (0, self.d_out_p - D_out))).astype(jnp.bfloat16)
        self.b2 = jnp.pad(b2, ((0, 0), (0, self.d_out_p - D_out)))         # f32

        # TODO(synk): batchnorm / dropout branches of __init__ are off by
        # default in the reference config and are not implemented here.

    def _flatten_inputs_bf16(self, inputs, Bp):
        """Cast-to-bf16 -> concat -> reshape -> single pad to (Bp, d_in_p)."""
        # TODO(synk): the concat still materializes (B, D_in) in HBM once;
        # fusing it into the kernel (per-input partial matmuls) is left out
        # to keep the kernel simple and robust.
        parts = [
            inputs["pos"], inputs["vel"], inputs["acc"],
            inputs["root_linear_vel"], inputs["root_angular_vel"],
            inputs["root_linear_acc"], inputs["root_angular_acc"],
            inputs["joint_centers"],
            inputs["root_pos_history"], inputs["root_euler_history"],
        ]
        concat = jnp.concatenate([p.astype(jnp.bfloat16) for p in parts],
                                 axis=-1)
        B = concat.shape[0]
        x = concat.reshape((B, -1))
        assert x.shape[1] == self.input_size
        # One pad op: batch rows up to Bp, feature cols up to d_in_p.
        x_p = jnp.pad(x, ((0, Bp - B), (0, self.d_in_p - self.input_size)))
        return x_p

    def __call__(self, inputs):
        B = inputs["pos"].shape[0]
        tile_b, Bp = _pick_batch_tile(B)

        x_p = self._flatten_inputs_bf16(inputs, Bp)

        y_p = mlp_forward(x_p, self.w1, self.b1, self.w2, self.b2,
                          activation=self.activation, tile_b=tile_b)
        # Small slice + upcast of the valid (B, 30*nf) block only.
        y = y_p[:B, :self.output_size].astype(jnp.float32)

        nf = self.num_output_frames
        return {
            "ground_contact_cops_in_root_frame":
                y[:, 0 * nf: 6 * nf].reshape((B, nf, 6)),
            "ground_contact_forces_in_root_frame":
                y[:, 6 * nf: 12 * nf].reshape((B, nf, 6)),
            "ground_contact_torques_in_root_frame":
                y[:, 12 * nf: 18 * nf].reshape((B, nf, 6)),
            "ground_contact_wrenches_in_root_frame":
                y[:, 18 * nf: 30 * nf].reshape((B, nf, 12)),
        }


# --------------------------------- main ------------------------------------ #
if __name__ == "__main__":
    # Small, module-consistent config.
    num_dofs = 4
    num_joints = 3
    history_len = 8
    stride = 2
    root_history_len = 2
    hidden_dims = (64,)
    batch = 2
    W = history_len // stride  # frames per window = 4

    model = FeedForwardBaselinePallas(
        num_dofs=num_dofs, num_joints=num_joints, history_len=history_len,
        output_data_format="all_frames", activation="relu", stride=stride,
        root_history_len=root_history_len, hidden_dims=hidden_dims,
        key=jax.random.PRNGKey(0))

    # Deterministic example inputs: (batch, W, feature_dim) each.
    key = jax.random.PRNGKey(0)
    keys = jax.random.split(key, 10)
    mk = lambda k, f: jax.random.normal(k, (batch, W, f), jnp.float32)
    inputs = {
        "pos": mk(keys[0], num_dofs),
        "vel": mk(keys[1], num_dofs),
        "acc": mk(keys[2], num_dofs),
        "root_linear_vel": mk(keys[3], 3),
        "root_angular_vel": mk(keys[4], 3),
        "root_linear_acc": mk(keys[5], 3),
        "root_angular_acc": mk(keys[6], 3),
        "joint_centers": mk(keys[7], num_joints * 3),
        "root_pos_history": mk(keys[8], root_history_len * 3),
        "root_euler_history": mk(keys[9], root_history_len * 3),
    }

    out = model(inputs)
    out = jax.tree_util.tree_map(jax.block_until_ready, out)

    # Sanity: shapes match the PyTorch module's output dict.
    nf = model.num_output_frames
    assert out["ground_contact_cops_in_root_frame"].shape == (batch, nf, 6)
    assert out["ground_contact_forces_in_root_frame"].shape == (batch, nf, 6)
    assert out["ground_contact_torques_in_root_frame"].shape == (batch, nf, 6)
    assert out["ground_contact_wrenches_in_root_frame"].shape == (batch, nf, 12)

    # Cross-check the Pallas MLP against a pure-JAX reference that applies the
    # same bf16 input / weight / output rounding (padded lanes are zero, so
    # using the padded weights directly is exact for the valid lanes).
    x_flat = jnp.concatenate(
        [inputs[k] for k in ["pos", "vel", "acc", "root_linear_vel",
                             "root_angular_vel", "root_linear_acc",
                             "root_angular_acc", "joint_centers",
                             "root_pos_history", "root_euler_history"]],
        axis=-1).reshape((batch, -1))
    x_bf = x_flat.astype(jnp.bfloat16).astype(jnp.float32)
    W1 = model.w1.astype(jnp.float32)[:model.input_size, :]
    W2 = model.w2.astype(jnp.float32)
    h = jnp.maximum(x_bf @ W1 + model.b1, 0.0)
    h_bf = h.astype(jnp.bfloat16).astype(jnp.float32)
    ref = (h_bf @ W2 + model.b2).astype(jnp.bfloat16).astype(jnp.float32)
    ref = ref[:, :model.output_size]

    got = jnp.concatenate([
        out["ground_contact_cops_in_root_frame"].reshape(batch, -1),
        out["ground_contact_forces_in_root_frame"].reshape(batch, -1),
        out["ground_contact_torques_in_root_frame"].reshape(batch, -1),
        out["ground_contact_wrenches_in_root_frame"].reshape(batch, -1)],
        axis=-1)
    assert jnp.allclose(got, ref, atol=2e-2, rtol=2e-2), (
        float(jnp.max(jnp.abs(got - ref))))

    print("KERNEL_OK")
</pallas_src>

<mosaic_0001>
module attributes {stable_mosaic.version = 11 : i64} {
  func.func @_mlp_kernel(%arg0: i32, %arg1: memref<16x256xbf16, #tpu.memory_space<vmem>>, %arg2: memref<256x128xbf16, #tpu.memory_space<vmem>>, %arg3: memref<1x128xf32, #tpu.memory_space<vmem>>, %arg4: memref<128x128xbf16, #tpu.memory_space<vmem>>, %arg5: memref<1x128xf32, #tpu.memory_space<vmem>>, %arg6: memref<16x128xbf16, #tpu.memory_space<vmem>>) attributes {dimension_semantics = [#tpu.dimension_semantics<parallel>], iteration_bounds = array<i64: 1>, scalar_prefetch = 0 : i64, scratch_operands = 0 : i64, tpu.core_type = #tpu.core_type<tc>, window_params = [{transform_indices = @transform_0, window_bounds = array<i64: 16, 256>}, {pipeline_mode = #tpu.pipeline_mode<synchronous>, transform_indices = @transform_1, window_bounds = array<i64: 256, 128>}, {pipeline_mode = #tpu.pipeline_mode<synchronous>, transform_indices = @transform_2, window_bounds = array<i64: 1, 128>}, {pipeline_mode = #tpu.pipeline_mode<synchronous>, transform_indices = @transform_3, window_bounds = array<i64: 128, 128>}, {pipeline_mode = #tpu.pipeline_mode<synchronous>, transform_indices = @transform_4, window_bounds = array<i64: 1, 128>}, {transform_indices = @transform_5, window_bounds = array<i64: 16, 128>}]} {
    %c0 = arith.constant 0 : index
    %c0_0 = arith.constant 0 : index
    %0 = vector.load %arg1[%c0, %c0_0] : memref<16x256xbf16, #tpu.memory_space<vmem>>, vector<16x256xbf16>
    %c0_1 = arith.constant 0 : index
    %c0_2 = arith.constant 0 : index
    %1 = vector.load %arg2[%c0_1, %c0_2] : memref<256x128xbf16, #tpu.memory_space<vmem>>, vector<256x128xbf16>
    %cst = arith.constant dense<0.000000e+00> : vector<16x128xf32>
    %2 = tpu.matmul %0, %1, %cst {dimension_numbers = #tpu.dot_dimension_numbers<[1], [0], [0], [1], [0, 0, 1, 1], [], []>} : vector<16x256xbf16>, vector<256x128xbf16>, vector<16x128xf32> -> vector<16x128xf32>
    %c0_3 = arith.constant 0 : index
    %c0_4 = arith.constant 0 : index
    %3 = vector.load %arg3[%c0_3, %c0_4] : memref<1x128xf32, #tpu.memory_space<vmem>>, vector<1x128xf32>
    %4 = vector.broadcast %3 : vector<1x128xf32> to vector<16x128xf32>
    %5 = arith.addf %2, %4 : vector<16x128xf32>
    %cst_5 = arith.constant 0.000000e+00 : f32
    %6 = vector.broadcast %cst_5 : f32 to vector<16x128xf32>
    %7 = arith.maximumf %5, %6 : vector<16x128xf32>
    %8 = arith.truncf %7 : vector<16x128xf32> to vector<16x128xbf16>
    %c0_6 = arith.constant 0 : index
    %c0_7 = arith.constant 0 : index
    %9 = vector.load %arg4[%c0_6, %c0_7] : memref<128x128xbf16, #tpu.memory_space<vmem>>, vector<128x128xbf16>
    %cst_8 = arith.constant dense<0.000000e+00> : vector<16x128xf32>
    %10 = tpu.matmul %8, %9, %cst_8 {dimension_numbers = #tpu.dot_dimension_numbers<[1], [0], [0], [1], [0, 0, 1, 1], [], []>} : vector<16x128xbf16>, vector<128x128xbf16>, vector<16x128xf32> -> vector<16x128xf32>
    %c0_9 = arith.constant 0 : index
    %c0_10 = arith.constant 0 : index
    %11 = vector.load %arg5[%c0_9, %c0_10] : memref<1x128xf32, #tpu.memory_space<vmem>>, vector<1x128xf32>
    %12 = vector.broadcast %11 : vector<1x128xf32> to vector<16x128xf32>
    %13 = arith.addf %10, %12 : vector<16x128xf32>
    %14 = arith.truncf %13 : vector<16x128xf32> to vector<16x128xbf16>
    %c0_11 = arith.constant 0 : index
    %c0_12 = arith.constant 0 : index
    %15 = vector.load %arg6[%c0_11, %c0_12] : memref<16x128xbf16, #tpu.memory_space<vmem>>, vector<16x128xbf16>
    tpu.vector_store %arg6[%c0_11, %c0_12], %14 {strides = array<i32>} : memref<16x128xbf16, #tpu.memory_space<vmem>>, vector<16x128xbf16>,
    return
  }
  func.func @transform_0(%arg0: i32) -> (i32, i32) {
    %c0_i32 = arith.constant 0 : i32
    %c0_i32_0 = arith.constant 0 : i32
    return %arg0, %c0_i32 : i32, i32
  }
  func.func @transform_1(%arg0: i32) -> (i32, i32) {
    %c0_i32 = arith.constant 0 : i32
    %c0_i32_0 = arith.constant 0 : i32
    %c0_i32_1 = arith.constant 0 : i32
    return %c0_i32, %c0_i32_0 : i32, i32
  }
  func.func @transform_2(%arg0: i32) -> (i32, i32) {
    %c0_i32 = arith.constant 0 : i32
    %c0_i32_0 = arith.constant 0 : i32
    %c0_i32_1 = arith.constant 0 : i32
    return %c0_i32, %c0_i32_0 : i32, i32
  }
  func.func @transform_3(%arg0: i32) -> (i32, i32) {
    %c0_i32 = arith.constant 0 : i32
    %c0_i32_0 = arith.constant 0 : i32
    %c0_i32_1 = arith.constant 0 : i32
    return %c0_i32, %c0_i32_0 : i32, i32
  }
  func.func @transform_4(%arg0: i32) -> (i32, i32) {
    %c0_i32 = arith.constant 0 : i32
    %c0_i32_0 = arith.constant 0 : i32
    %c0_i32_1 = arith.constant 0 : i32
    return %c0_i32, %c0_i32_0 : i32, i32
  }
  func.func @transform_5(%arg0: i32) -> (i32, i32) {
    %c0_i32 = arith.constant 0 : i32
    %c0_i32_0 = arith.constant 0 : i32
    return %arg0, %c0_i32 : i32, i32
  }
}

</mosaic_0001>

<llo_original>
// kernel: tpu_custom_call.1
$region0: #{tpu_custom_call.1}
  #allocation0 [shape = 'u32[]', space=smem, size = 0x4, offset = 0x4, fixed_abs, tag = 'smem constant byte address 0x4 - core index']
  #allocation1 [shape = 'u32[144,128]{1,0:T(1,128)}', space=vmem, size = 0x12000, scoped, tag = 'internal scratch']
  %s0 = inlined_call_operand.hbm [shape: bf16[16,256], index: 0, kind: input, shape index: {}]
  %s1 = inlined_call_operand.hbm [shape: bf16[256,128], index: 1, kind: input, shape index: {}]
  %s2 = inlined_call_operand.vmem [shape: f32[1,128], index: 2, kind: input, shape index: {}]
  %s3 = inlined_call_operand.hbm [shape: bf16[128,128], index: 3, kind: input, shape index: {}]
  %s4 = inlined_call_operand.vmem [shape: f32[1,128], index: 4, kind: input, shape index: {}]
  %s5 = inlined_call_operand.hbm [shape: bf16[16,128], index: 5, kind: output, shape index: {}]
  %s6 = sld [smem:[#allocation0]]
  $region42: #{tpu_custom_call.1} parent=0
    _
  %s8 = ssub.s32 1, %s6
  %s9 = scalar_select 0, %s8, %s6
  $region1: #{tpu_custom_call.1} parent=0
    #allocation2 [shape = 'u8[8192]{0}', space=vmem, size = 0x2000, scoped, tag = 'input window, operand 0, single buffered']
    #allocation3 [shape = 's32[1]{0}', space=sflag, size = 0x4, scoped, tag = 'scoped memory for tpu_custom_call.1']
    #allocation4 [shape = 's32[1]{0}', space=sflag, size = 0x4, scoped, tag = 'scoped memory for tpu_custom_call.1']
    #allocation5 [shape = 'u8[65536]{0}', space=vmem, size = 0x10000, scoped, tag = 'input window, operand 1, single buffered']
    #allocation6 [shape = 's32[1]{0}', space=sflag, size = 0x4, scoped, tag = 'scoped memory for tpu_custom_call.1']
    #allocation7 [shape = 'u8[32768]{0}', space=vmem, size = 0x8000, scoped, tag = 'input window, operand 3, single buffered']
    #allocation8 [shape = 'u8[4096]{0}', space=vmem, size = 0x1000, scoped, tag = 'output window, operand 0, single buffered']
    %10 = vsyncpa [#allocation3], 0
    %11 = vsyncpa [#allocation6], 0
    %12 = vsyncpa [#allocation4], 0
    // Predicated region
    $region2: #{tpu_custom_call.1} parent=1 // pred_check
      _
    $region3: #{tpu_custom_call.1} parent=1 // pred_check_branch
      %14 = sbr.rel (0) target = $region5
    $region4: #{tpu_custom_call.1} parent=1 // pred_region
      %s16 = ssub.s32 256, 256
      %17 = vsyncadd [#allocation3], %s16
      %s18 = sshll.u32 [#allocation2], 4
      %s19 = int_to_ptr.vmem [resolvable:$true] %s18
      %24 = dma.hbm_to_vmem [thread:$0]  %s0, 256, %s19, [#allocation3], 128, 128, 8
    $region5: #{tpu_custom_call.1} parent=1 // pred_fallthru
      _
    // Predicated region
    $region6: #{tpu_custom_call.1} parent=1 // pred_check
      _
    $region7: #{tpu_custom_call.1} parent=1 // pred_check_branch
      %26 = sbr.rel (0) target = $region9
    $region8: #{tpu_custom_call.1} parent=1 // pred_region
      %s28 = ssub.s32 2048, 2048
      %29 = vsyncadd [#allocation6], %s28
      %s30 = sshll.u32 [#allocation5], 4
      %s31 = int_to_ptr.vmem [resolvable:$true] %s30
      %36 = dma.hbm_to_vmem [thread:$0]  %s1, 2048, %s31, [#allocation6], 64, 64, 4
    $region9: #{tpu_custom_call.1} parent=1 // pred_fallthru
      _
    // Predicated region
    $region10: #{tpu_custom_call.1} parent=1 // pred_check
      _
    $region11: #{tpu_custom_call.1} parent=1 // pred_check_branch
      %38 = sbr.rel (0) target = $region13
    $region12: #{tpu_custom_call.1} parent=1 // pred_region
      _
    $region13: #{tpu_custom_call.1} parent=1 // pred_fallthru
      _
    // Predicated region
    $region14: #{tpu_custom_call.1} parent=1 // pred_check
      _
    $region15: #{tpu_custom_call.1} parent=1 // pred_check_branch
      %40 = sbr.rel (0) target = $region17
    $region16: #{tpu_custom_call.1} parent=1 // pred_region
      %s42 = ssub.s32 1024, 1024
      %43 = vsyncadd [#allocation6], %s42
      %s44 = sshll.u32 [#allocation7], 4
      %s45 = int_to_ptr.vmem [resolvable:$true] %s44
      %50 = dma.hbm_to_vmem [thread:$0]  %s3, 1024, %s45, [#allocation6], 64, 64, 4
    $region17: #{tpu_custom_call.1} parent=1 // pred_fallthru
      _
    // Predicated region
    $region18: #{tpu_custom_call.1} parent=1 // pred_check
      _
    $region19: #{tpu_custom_call.1} parent=1 // pred_check_branch
      %52 = sbr.rel (0) target = $region21
    $region20: #{tpu_custom_call.1} parent=1 // pred_region
      _
    $region21: #{tpu_custom_call.1} parent=1 // pred_fallthru
      _
    // Predicated region
    $region22: #{tpu_custom_call.1} parent=1 // pred_check
      _
    $region23: #{tpu_custom_call.1} parent=1 // pred_check_branch
      %54 = sbr.rel (0) target = $region25
    $region24: #{tpu_custom_call.1} parent=1 // pred_region
      %55 = dma.done [#allocation3], 256
    $region25: #{tpu_custom_call.1} parent=1 // pred_fallthru
      _
    // Predicated region
    $region26: #{tpu_custom_call.1} parent=1 // pred_check
      _
    $region27: #{tpu_custom_call.1} parent=1 // pred_check_branch
      %57 = sbr.rel (0) target = $region29
    $region28: #{tpu_custom_call.1} parent=1 // pred_region
      %58 = dma.done [#allocation6], 2048
    $region29: #{tpu_custom_call.1} parent=1 // pred_fallthru
      _
    // Predicated region
    $region30: #{tpu_custom_call.1} parent=1 // pred_check
      _
    $region31: #{tpu_custom_call.1} parent=1 // pred_check_branch
      %60 = sbr.rel (0) target = $region33
    $region32: #{tpu_custom_call.1} parent=1 // pred_region
      %61 = dma.done [#allocation6], 1024
    $region33: #{tpu_custom_call.1} parent=1 // pred_fallthru
      _
    %v63 = vld [vmem:[#allocation2] sm:$0xff]
    %v64 = vld [vmem:[#allocation2 + $0x8] sm:$0xff]
    %v65 = vld [vmem:[#allocation5] sm:$0xf]
    %v66 = vld [vmem:[#allocation5 + $0x4] sm:$0xf]
    %v67 = vld [vmem:[#allocation5 + $0x8] sm:$0xf]
    %v68 = vld [vmem:[#allocation5 + $0xc] sm:$0xf]
    %v69 = vld [vmem:[#allocation5 + $0x10] sm:$0xf]
    %v70 = vld [vmem:[#allocation5 + $0x14] sm:$0xf]
    %v71 = vld [vmem:[#allocation5 + $0x18] sm:$0xf]
    %v72 = vld [vmem:[#allocation5 + $0x1c] sm:$0xf]
    %v73 = vld [vmem:[#allocation5 + $0x20] sm:$0xf]
    %v74 = vld [vmem:[#allocation5 + $0x24] sm:$0xf]
    %v75 = vld [vmem:[#allocation5 + $0x28] sm:$0xf]
    %v76 = vld [vmem:[#allocation5 + $0x2c] sm:$0xf]
    %v77 = vld [vmem:[#allocation5 + $0x30] sm:$0xf]
    %v78 = vld [vmem:[#allocation5 + $0x34] sm:$0xf]
    %v79 = vld [vmem:[#allocation5 + $0x38] sm:$0xf]
    %v80 = vld [vmem:[#allocation5 + $0x3c] sm:$0xf]
    %v81 = vld [vmem:[#allocation5 + $0x40] sm:$0xf]
    %v82 = vld [vmem:[#allocation5 + $0x44] sm:$0xf]
    %v83 = vld [vmem:[#allocation5 + $0x48] sm:$0xf]
    %v84 = vld [vmem:[#allocation5 + $0x4c] sm:$0xf]
    %v85 = vld [vmem:[#allocation5 + $0x50] sm:$0xf]
    %v86 = vld [vmem:[#allocation5 + $0x54] sm:$0xf]
    %v87 = vld [vmem:[#allocation5 + $0x58] sm:$0xf]
    %v88 = vld [vmem:[#allocation5 + $0x5c] sm:$0xf]
    %v89 = vld [vmem:[#allocation5 + $0x60] sm:$0xf]
    %v90 = vld [vmem:[#allocation5 + $0x64] sm:$0xf]
    %v91 = vld [vmem:[#allocation5 + $0x68] sm:$0xf]
    %v92 = vld [vmem:[#allocation5 + $0x6c] sm:$0xf]
    %v93 = vld [vmem:[#allocation5 + $0x70] sm:$0xf]
    %v94 = vld [vmem:[#allocation5 + $0x74] sm:$0xf]
    %v95 = vld [vmem:[#allocation5 + $0x78] sm:$0xf]
    %v96 = vld [vmem:[#allocation5 + $0x7c] sm:$0xf]
    %v97 = vld [vmem:[%s2] sm:$0x1]
    %v99 = vlaneseq
    %v100 = vshrl.u32 %v99, 7
    %v101 = vsub.s32 0, %v100
    %v102 = vrot.slane %v97, %v101
    %v106 = vunpack.c.l.b16 %v63
    %v107 = vunpack.c.h.b16 %v63
    %v108 = vunpack.c.l.b16 %v64
    %v109 = vunpack.c.h.b16 %v64
    %v110 = vpack.c.b16 %v108, %v106
    %v111 = vpack.c.b16 %v109, %v107
    %v146 = vunpack.c.l.b16 %v65
    %v147 = vunpack.c.l.b16 %v66
    %v148 = vunpack.c.l.b16 %v67
    %v149 = vunpack.c.l.b16 %v68
    %v150 = vunpack.c.l.b16 %v69
    %v151 = vunpack.c.l.b16 %v70
    %v152 = vunpack.c.l.b16 %v71
    %v153 = vunpack.c.l.b16 %v72
    %v154 = vunpack.c.l.b16 %v73
    %v155 = vunpack.c.l.b16 %v74
    %v156 = vunpack.c.l.b16 %v75
    %v157 = vunpack.c.l.b16 %v76
    %v158 = vunpack.c.l.b16 %v77
    %v159 = vunpack.c.l.b16 %v78
    %v160 = vunpack.c.l.b16 %v79
    %v161 = vunpack.c.l.b16 %v80
    %v162 = vunpack.c.l.b16 %v81
    %v163 = vunpack.c.l.b16 %v82
    %v164 = vunpack.c.l.b16 %v83
    %v165 = vunpack.c.l.b16 %v84
    %v166 = vunpack.c.l.b16 %v85
    %v167 = vunpack.c.l.b16 %v86
    %v168 = vunpack.c.l.b16 %v87
    %v169 = vunpack.c.l.b16 %v88
    %v170 = vunpack.c.l.b16 %v89
    %v171 = vunpack.c.l.b16 %v90
    %v172 = vunpack.c.l.b16 %v91
    %v173 = vunpack.c.l.b16 %v92
    %v174 = vunpack.c.l.b16 %v93
    %v175 = vunpack.c.l.b16 %v94
    %v176 = vunpack.c.l.b16 %v95
    %v177 = vunpack.c.l.b16 %v96
    %v178 = vpack.c.b16 %v147, %v146
    %v179 = vpack.c.b16 %v149, %v148
    %v180 = vpack.c.b16 %v151, %v150
    %v181 = vpack.c.b16 %v153, %v152
    %v182 = vpack.c.b16 %v155, %v154
    %v183 = vpack.c.b16 %v157, %v156
    %v184 = vpack.c.b16 %v159, %v158
    %v185 = vpack.c.b16 %v161, %v160
    %v186 = vpack.c.b16 %v163, %v162
    %v187 = vpack.c.b16 %v165, %v164
    %v188 = vpack.c.b16 %v167, %v166
    %v189 = vpack.c.b16 %v169, %v168
    %v190 = vpack.c.b16 %v171, %v170
    %v191 = vpack.c.b16 %v173, %v172
    %v192 = vpack.c.b16 %v175, %v174
    %v193 = vpack.c.b16 %v177, %v176
    %210 = vmatprep.subr.bf16.mxu0 0
    %211 = vmatpush1.bf16.msra.mxu0 %v178
    %212 = vmatprep.subr.bf16.mxu0 0
    %213 = vmatpush1.bf16.msra.mxu0 %v179
    %214 = vmatprep.subr.bf16.mxu0 0
    %215 = vmatpush1.bf16.msra.mxu0 %v180
    %216 = vmatprep.subr.bf16.mxu0 0
    %217 = vmatpush1.bf16.msra.mxu0 %v181
    %218 = vmatprep.subr.bf16.mxu0 0
    %219 = vmatpush1.bf16.msra.mxu0 %v182
    %220 = vmatprep.subr.bf16.mxu0 0
    %221 = vmatpush1.bf16.msra.mxu0 %v183
    %222 = vmatprep.subr.bf16.mxu0 0
    %223 = vmatpush1.bf16.msra.mxu0 %v184
    %224 = vmatprep.subr.bf16.mxu0 0
    %225 = vmatpush1.bf16.msra.mxu0 %v185
    %226 = vmatprep.subr.bf16.mxu0 0
    %227 = vmatpush1.bf16.msra.mxu0 %v186
    %228 = vmatprep.subr.bf16.mxu0 0
    %229 = vmatpush1.bf16.msra.mxu0 %v187
    %230 = vmatprep.subr.bf16.mxu0 0
    %231 = vmatpush1.bf16.msra.mxu0 %v188
    %232 = vmatprep.subr.bf16.mxu0 0
    %233 = vmatpush1.bf16.msra.mxu0 %v189
    %234 = vmatprep.subr.bf16.mxu0 0
    %235 = vmatpush1.bf16.msra.mxu0 %v190
    %236 = vmatprep.subr.bf16.mxu0 0
    %237 = vmatpush1.bf16.msra.mxu0 %v191
    %238 = vmatprep.subr.bf16.mxu0 0
    %239 = vmatpush1.bf16.msra.mxu0 %v192
    %240 = vmatprep.subr.bf16.mxu0 0
    %241 = vmatpush1.bf16.msra.mxu0 %v193
    %242 = vmatprep.mubr.bf16.mxu0 %v111
    %243 = vmatmul.mubr.bf16.gmra.mrb[0].mxu0 %v110
    %v244 = vpop.f32.mrb[0].mxu0
    %v245 = vadd.f32 %v102, %v244
    %v246 = vpop.f32.mrb[0].mxu0
    %v247 = vpop.f32.mrb[0].mxu0
    %v248 = vadd.f32 %v102, %v247
    %v249 = vpop.f32.mrb[0].mxu0
    %250 = vdwg.mxu0
    %v251 = vmax.f32 %v245, 0.0
    %v252 = vmax.f32 %v248, 0.0
    %v253 = vpack.c.bf16 %v252, %v251
    %v254 = vld [vmem:[#allocation7] sm:$0xf]
    %v255 = vld [vmem:[#allocation7 + $0x4] sm:$0xf]
    %v256 = vld [vmem:[#allocation7 + $0x8] sm:$0xf]
    %v257 = vld [vmem:[#allocation7 + $0xc] sm:$0xf]
    %v258 = vld [vmem:[#allocation7 + $0x10] sm:$0xf]
    %v259 = vld [vmem:[#allocation7 + $0x14] sm:$0xf]
    %v260 = vld [vmem:[#allocation7 + $0x18] sm:$0xf]
    %v261 = vld [vmem:[#allocation7 + $0x1c] sm:$0xf]
    %v262 = vld [vmem:[#allocation7 + $0x20] sm:$0xf]
    %v263 = vld [vmem:[#allocation7 + $0x24] sm:$0xf]
    %v264 = vld [vmem:[#allocation7 + $0x28] sm:$0xf]
    %v265 = vld [vmem:[#allocation7 + $0x2c] sm:$0xf]
    %v266 = vld [vmem:[#allocation7 + $0x30] sm:$0xf]
    %v267 = vld [vmem:[#allocation7 + $0x34] sm:$0xf]
    %v268 = vld [vmem:[#allocation7 + $0x38] sm:$0xf]
    %v269 = vld [vmem:[#allocation7 + $0x3c] sm:$0xf]
    %v270 = vld [vmem:[%s4] sm:$0x1]
    %v272 = vlaneseq
    %v273 = vshrl.u32 %v272, 7
    %v274 = vsub.s32 0, %v273
    %v275 = vrot.slane %v270, %v274
    %v293 = vunpack.c.l.b16 %v254
    %v294 = vunpack.c.l.b16 %v255
    %v295 = vunpack.c.l.b16 %v256
    %v296 = vunpack.c.l.b16 %v257
    %v297 = vunpack.c.l.b16 %v258
    %v298 = vunpack.c.l.b16 %v259
    %v299 = vunpack.c.l.b16 %v260
    %v300 = vunpack.c.l.b16 %v261
    %v301 = vunpack.c.l.b16 %v262
    %v302 = vunpack.c.l.b16 %v263
    %v303 = vunpack.c.l.b16 %v264
    %v304 = vunpack.c.l.b16 %v265
    %v305 = vunpack.c.l.b16 %v266
    %v306 = vunpack.c.l.b16 %v267
    %v307 = vunpack.c.l.b16 %v268
    %v308 = vunpack.c.l.b16 %v269
    %v309 = vpack.c.b16 %v294, %v293
    %v310 = vpack.c.b16 %v296, %v295
    %v311 = vpack.c.b16 %v298, %v297
    %v312 = vpack.c.b16 %v300, %v299
    %v313 = vpack.c.b16 %v302, %v301
    %v314 = vpack.c.b16 %v304, %v303
    %v315 = vpack.c.b16 %v306, %v305
    %v316 = vpack.c.b16 %v308, %v307
    %325 = vmatprep.subr.bf16.mxu0 0
    %326 = vmatpush1.bf16.msra.mxu0 %v309
    %327 = vmatprep.subr.bf16.mxu0 0
    %328 = vmatpush1.bf16.msra.mxu0 %v310
    %329 = vmatprep.subr.bf16.mxu0 0
    %330 = vmatpush1.bf16.msra.mxu0 %v311
    %331 = vmatprep.subr.bf16.mxu0 0
    %332 = vmatpush1.bf16.msra.mxu0 %v312
    %333 = vmatprep.subr.bf16.mxu0 0
    %334 = vmatpush1.bf16.msra.mxu0 %v313
    %335 = vmatprep.subr.bf16.mxu0 0
    %336 = vmatpush1.bf16.msra.mxu0 %v314
    %337 = vmatprep.subr.bf16.mxu0 0
    %338 = vmatpush1.bf16.msra.mxu0 %v315
    %339 = vmatprep.subr.bf16.mxu0 0
    %340 = vmatpush1.bf16.msra.mxu0 %v316
    %341 = vmatprep.subr.bf16.mxu0 0
    %342 = vmatpush1.bf16.msra.mxu0 0
    %343 = vmatprep.subr.bf16.mxu0 0
    %344 = vmatpush1.bf16.msra.mxu0 0
    %345 = vmatprep.subr.bf16.mxu0 0
    %346 = vmatpush1.bf16.msra.mxu0 0
    %347 = vmatprep.subr.bf16.mxu0 0
    %348 = vmatpush1.bf16.msra.mxu0 0
    %349 = vmatprep.subr.bf16.mxu0 0
    %350 = vmatpush1.bf16.msra.mxu0 0
    %351 = vmatprep.subr.bf16.mxu0 0
    %352 = vmatpush1.bf16.msra.mxu0 0
    %353 = vmatprep.subr.bf16.mxu0 0
    %354 = vmatpush1.bf16.msra.mxu0 0
    %355 = vmatprep.subr.bf16.mxu0 0
    %356 = vmatpush1.bf16.msra.mxu0 0
    %357 = vmatprep.mubr.bf16.mxu0 0
    %358 = vmatmul.mubr.bf16.gmra.mrb[0].mxu0 %v253
    %v359 = vpop.f32.mrb[0].mxu0
    %v360 = vadd.f32 %v275, %v359
    %v361 = vpop.f32.mrb[0].mxu0
    %v362 = vpop.f32.mrb[0].mxu0
    %v363 = vadd.f32 %v275, %v362
    %v364 = vpop.f32.mrb[0].mxu0
    %365 = vdwg.mxu0
    %v366 = vpack.c.bf16 %v363, %v360
    %v368 = vunpack.c.l.b16 %v366
    %v369 = vunpack.c.h.b16 %v366
    %v370 = vpack.c.b16 %v368, %v368
    %v371 = vpack.c.b16 %v369, %v369
    %374 = vst [vmem:[#allocation8] sm:$0xf] %v370
    %375 = vst [vmem:[#allocation8 + $0x4] sm:$0xf] %v371
    // Predicated region
    $region34: #{tpu_custom_call.1} parent=1 // pred_check
      _
    $region35: #{tpu_custom_call.1} parent=1 // pred_check_branch
      %377 = sbr.rel (0) target = $region37
    $region36: #{tpu_custom_call.1} parent=1 // pred_region
      %s379 = ssub.s32 128, 128
      %380 = vsyncadd [#allocation4], %s379
      %s381 = sshll.u32 [#allocation8], 4
      %s382 = int_to_ptr.vmem [resolvable:$true] %s381
      %387 = dma.vmem_to_hbm [thread:$0]  %s382, 128, %s5, [#allocation4], 64, 64, 4
    $region37: #{tpu_custom_call.1} parent=1 // pred_fallthru
      _
    // Predicated region
    $region38: #{tpu_custom_call.1} parent=1 // pred_check
      _
    $region39: #{tpu_custom_call.1} parent=1 // pred_check_branch
      %389 = sbr.rel (0) target = $region41
    $region40: #{tpu_custom_call.1} parent=1 // pred_region
      %390 = dma.done [#allocation4], 128
    $region41: #{tpu_custom_call.1} parent=1 // pred_fallthru
      _
    %391 = vsyncpa [#allocation3], 1
    %392 = vsyncpa [#allocation6], 1
    %393 = vsyncpa [#allocation4], 1

</llo_original>
